<compile_context>
chip_gen: v7x
topology: tpu7x:2x2x1
jax: 0.10.0
libtpu: 0.0.40
codegen_flags: <defaults>
</compile_context>

<pallas_src>
import functools

import jax
import jax.numpy as jnp
from jax.experimental import pallas as pl
from jax.experimental.pallas import tpu as pltpu

LANES = 128
MAX_TILE_ROWS = 2048   # 2048 x 128 x 4 B = 1 MiB per input per grid step
CHUNK_ROWS = 256       # rows reduced per inner (unrolled) step


def _round_up(x: int, m: int) -> int:
    return ((x + m - 1) // m) * m


def _l1_sum_kernel(p_ref, t_ref, o_ref, *, total_rows, tile_rows, chunk_rows,
                   steps_per_core):
    """Accumulates sum(|p - t|) into a per-core (1, 8, 128) f32 output block."""
    core = pl.program_id(0)   # "parallel" axis (megacore split on v7x)
    step = pl.program_id(1)   # "arbitrary" sequential reduction axis

    # Output block index is constant along `step`, so o_ref stays VMEM-resident
    # across the whole reduction for this core: use it directly as accumulator.
    @pl.when(step == 0)
    def _():
        o_ref[...] = jnp.zeros_like(o_ref)

    # Row offset of this (unclamped) block within the full (total_rows, 128)
    # array. Rows >= total_rows (ragged last block, block > array for tiny
    # inputs, or clamped extra steps) are masked to zero below.
    row_base = (core * steps_per_core + step) * tile_rows
    rid = jax.lax.broadcasted_iota(jnp.int32, (chunk_rows, LANES), 0)  # hoisted

    for c in range(tile_rows // chunk_rows):   # static, fully unrolled
        off = c * chunk_rows
        p = p_ref[pl.ds(off, chunk_rows), :].astype(jnp.float32)  # no-op for f32
        t = t_ref[pl.ds(off, chunk_rows), :].astype(jnp.float32)
        d = jnp.abs(p - t)
        valid = (rid + (row_base + off)) < total_rows
        d = jnp.where(valid, d, 0.0)
        # Lane/sublane-parallel partial sums: reduce over the leading axis only
        # (pure VPU vreg adds; no cross-lane XLU work in the hot loop).
        o_ref[...] += d.reshape(1, chunk_rows // 8, 8, LANES).sum(axis=1)


def l1_norm(prediction: jax.Array, target: jax.Array) -> jax.Array:
    """Returns sum(|prediction - target|) / numel(prediction) as f32 scalar."""
    assert prediction.shape == target.shape, "shape mismatch"
    numel = prediction.size
    assert numel > 0

    p = prediction.reshape(-1)
    t = target.reshape(-1)

    rem = numel % LANES
    if rem:
        # TODO(synk): rare non-lane-aligned case pays one small pad copy; the
        # lane-aligned path below is fully zero-copy.
        pad = LANES - rem
        p = jnp.pad(p, (0, pad))
        t = jnp.pad(t, (0, pad))

    rows = p.size // LANES
    p2 = p.reshape(rows, LANES)   # free reshape (contiguous)
    t2 = t.reshape(rows, LANES)

    # Tile/chunk sizing: ~1 MiB blocks for large inputs, shrink for small ones.
    if rows >= MAX_TILE_ROWS:
        tile_rows, chunk_rows = MAX_TILE_ROWS, CHUNK_ROWS
    elif rows >= CHUNK_ROWS:
        chunk_rows = CHUNK_ROWS
        tile_rows = _round_up(rows, CHUNK_ROWS)
    else:
        chunk_rows = _round_up(rows, 16)
        tile_rows = chunk_rows

    total_steps = pl.cdiv(rows, tile_rows)
    num_cores = 2 if total_steps >= 2 else 1   # v7x megacore; harmless on 1-TC chips
    steps_per_core = pl.cdiv(total_steps, num_cores)

    if num_cores * steps_per_core == total_steps:
        def in_map(core, step):
            return (core * steps_per_core + step, 0)
    else:
        # Odd step count: clamp the trailing extra step onto a valid block; its
        # rows are fully masked inside the kernel so it contributes zero.
        def in_map(core, step):
            return (jnp.minimum(core * steps_per_core + step, total_steps - 1), 0)

    kernel = functools.partial(
        _l1_sum_kernel, total_rows=rows, tile_rows=tile_rows,
        chunk_rows=chunk_rows, steps_per_core=steps_per_core)

    partials = pl.pallas_call(
        kernel,
        out_shape=jax.ShapeDtypeStruct((num_cores, 8, LANES), jnp.float32),
        grid_spec=pltpu.PrefetchScalarGridSpec(
            num_scalar_prefetch=0,
            grid=(num_cores, steps_per_core),
            in_specs=[
                pl.BlockSpec((tile_rows, LANES), in_map),
                pl.BlockSpec((tile_rows, LANES), in_map),
            ],
            out_specs=pl.BlockSpec((1, 8, LANES),
                                   lambda core, step: (core, 0, 0)),
        ),
        compiler_params=pltpu.CompilerParams(
            dimension_semantics=("parallel", "arbitrary")),
    )(p2, t2)

    # Single tiny cross-lane reduction + mean in plain JAX.
    return jnp.sum(partials) / jnp.float32(numel)


if __name__ == "__main__":
    key = jax.random.PRNGKey(0)
    k1, k2, k3, k4 = jax.random.split(key, 4)
    # NCHW irradiance-like tensors: batch=2, channels=4, spatial=16x16
    pred = jax.random.normal(k1, (2, 4, 16, 16), dtype=jnp.float32)
    targ = jax.random.normal(k2, (2, 4, 16, 16), dtype=jnp.float32)
    # wavelet-like tensors: 4 subbands x 4 channels, half spatial resolution
    pred_w = jax.random.normal(k3, (2, 16, 8, 8), dtype=jnp.float32)
    targ_w = jax.random.normal(k4, (2, 16, 8, 8), dtype=jnp.float32)

    l1_irridiance = l1_norm(pred, targ)
    l1_wavelet = l1_norm(pred_w, targ_w)
    jax.block_until_ready((l1_irridiance, l1_wavelet))

    # sanity check against plain-JAX reference
    ref_irr = jnp.sum(jnp.abs(pred - targ)) / pred.size
    ref_wav = jnp.sum(jnp.abs(pred_w - targ_w)) / pred_w.size
    assert jnp.allclose(l1_irridiance, ref_irr, rtol=1e-6, atol=1e-6), (l1_irridiance, ref_irr)
    assert jnp.allclose(l1_wavelet, ref_wav, rtol=1e-6, atol=1e-6), (l1_wavelet, ref_wav)

    # TODO(synk): CriterionOld's SSIM, LPIPS(net='alex'), preprocessor.postprocess
    # and reinhard_norm terms are external modules not defined in the spec; only
    # the L1Norm terms are implemented as Pallas kernels here.
    print("KERNEL_OK")
</pallas_src>

<mosaic_0001>
module attributes {stable_mosaic.version = 11 : i64} {
  func.func @_l1_sum_kernel(%arg0: i32, %arg1: i32, %arg2: memref<16x128xf32, #tpu.memory_space<vmem>>, %arg3: memref<16x128xf32, #tpu.memory_space<vmem>>, %arg4: memref<1x8x128xf32, #tpu.memory_space<vmem>>) attributes {dimension_semantics = [#tpu.dimension_semantics<parallel>, #tpu.dimension_semantics<arbitrary>], iteration_bounds = array<i64: 1, 1>, scalar_prefetch = 0 : i64, scratch_operands = 0 : i64, tpu.core_type = #tpu.core_type<tc>, window_params = [{transform_indices = @transform_0, window_bounds = array<i64: 16, 128>}, {transform_indices = @transform_1, window_bounds = array<i64: 16, 128>}, {transform_indices = @transform_2, window_bounds = array<i64: 1, 8, 128>}]} {
    %c0_i32 = arith.constant 0 : i32
    %0 = arith.cmpi eq, %arg1, %c0_i32 : i32
    %1 = arith.extui %0 : i1 to i32
    %c0_i32_0 = arith.constant 0 : i32
    %2 = arith.cmpi ne, %1, %c0_i32_0 : i32
    scf.if %2 {
      %cst_13 = arith.constant 0.000000e+00 : f32
      %23 = vector.broadcast %cst_13 : f32 to vector<1x8x128xf32>
      %c0_14 = arith.constant 0 : index
      %c0_15 = arith.constant 0 : index
      %c0_16 = arith.constant 0 : index
      %24 = vector.load %arg4[%c0_14, %c0_15, %c0_16] : memref<1x8x128xf32, #tpu.memory_space<vmem>>, vector<1x8x128xf32>
      tpu.vector_store %arg4[%c0_14, %c0_15, %c0_16], %23 {strides = array<i32>} : memref<1x8x128xf32, #tpu.memory_space<vmem>>, vector<1x8x128xf32>,
    } else {
    }
    %c1_i32 = arith.constant 1 : i32
    %3 = arith.muli %arg0, %c1_i32 : i32
    %4 = arith.addi %3, %arg1 : i32
    %c16_i32 = arith.constant 16 : i32
    %5 = arith.muli %4, %c16_i32 : i32
    %6 = tpu.iota {dimensions = array<i32: 0>} : vector<16x128xi32>
    %c0 = arith.constant 0 : index
    %c0_1 = arith.constant 0 : index
    %7 = vector.load %arg2[%c0, %c0_1] : memref<16x128xf32, #tpu.memory_space<vmem>>, vector<16x128xf32>
    %c0_2 = arith.constant 0 : index
    %c0_3 = arith.constant 0 : index
    %8 = vector.load %arg3[%c0_2, %c0_3] : memref<16x128xf32, #tpu.memory_space<vmem>>, vector<16x128xf32>
    %9 = arith.subf %7, %8 : vector<16x128xf32>
    %10 = math.absf %9 : vector<16x128xf32>
    %c0_i32_4 = arith.constant 0 : i32
    %11 = arith.addi %5, %c0_i32_4 : i32
    %12 = vector.broadcast %11 : i32 to vector<16x128xi32>
    %13 = arith.addi %6, %12 : vector<16x128xi32>
    %c16_i32_5 = arith.constant 16 : i32
    %14 = vector.broadcast %c16_i32_5 : i32 to vector<16x128xi32>
    %15 = arith.cmpi slt, %13, %14 : vector<16x128xi32>
    %cst = arith.constant 0.000000e+00 : f32
    %16 = vector.broadcast %cst : f32 to vector<16x128xf32>
    %17 = arith.select %15, %10, %16 : vector<16x128xi1>, vector<16x128xf32>
    %c0_6 = arith.constant 0 : index
    %c0_7 = arith.constant 0 : index
    %c0_8 = arith.constant 0 : index
    %18 = vector.load %arg4[%c0_6, %c0_7, %c0_8] : memref<1x8x128xf32, #tpu.memory_space<vmem>>, vector<1x8x128xf32>
    %19 = vector.shape_cast %17 : vector<16x128xf32> to vector<1x2x8x128xf32>
    %cst_9 = arith.constant dense<0.000000e+00> : vector<1x8x128xf32>
    %20 = vector.multi_reduction <add>, %19, %cst_9 [1] : vector<1x2x8x128xf32> to vector<1x8x128xf32>
    %21 = arith.addf %18, %20 : vector<1x8x128xf32>
    %c0_10 = arith.constant 0 : index
    %c0_11 = arith.constant 0 : index
    %c0_12 = arith.constant 0 : index
    %22 = vector.load %arg4[%c0_10, %c0_11, %c0_12] : memref<1x8x128xf32, #tpu.memory_space<vmem>>, vector<1x8x128xf32>
    tpu.vector_store %arg4[%c0_10, %c0_11, %c0_12], %21 {strides = array<i32>} : memref<1x8x128xf32, #tpu.memory_space<vmem>>, vector<1x8x128xf32>,
    return
  }
  func.func @transform_0(%arg0: i32, %arg1: i32) -> (i32, i32) {
    %c1_i32 = arith.constant 1 : i32
    %0 = arith.muli %arg0, %c1_i32 : i32
    %1 = arith.addi %0, %arg1 : i32
    %c0_i32 = arith.constant 0 : i32
    %c0_i32_0 = arith.constant 0 : i32
    return %1, %c0_i32 : i32, i32
  }
  func.func @transform_1(%arg0: i32, %arg1: i32) -> (i32, i32) {
    %c1_i32 = arith.constant 1 : i32
    %0 = arith.muli %arg0, %c1_i32 : i32
    %1 = arith.addi %0, %arg1 : i32
    %c0_i32 = arith.constant 0 : i32
    %c0_i32_0 = arith.constant 0 : i32
    return %1, %c0_i32 : i32, i32
  }
  func.func @transform_2(%arg0: i32, %arg1: i32) -> (i32, i32, i32) {
    %c0_i32 = arith.constant 0 : i32
    %c0_i32_0 = arith.constant 0 : i32
    %c0_i32_1 = arith.constant 0 : i32
    return %arg0, %c0_i32, %c0_i32_0 : i32, i32, i32
  }
}

</mosaic_0001>

<llo_original>
// kernel: tpu_custom_call.1
$region0: #{tpu_custom_call.1}
  #allocation0 [shape = 'u32[]', space=smem, size = 0x4, offset = 0x4, fixed_abs, tag = 'smem constant byte address 0x4 - core index']
  #allocation1 [shape = 'u32[144,128]{1,0:T(1,128)}', space=vmem, size = 0x12000, scoped, tag = 'internal scratch']
  %s0 = inlined_call_operand.hbm [shape: f32[16,128], index: 0, kind: input, shape index: {}]
  %s1 = inlined_call_operand.hbm [shape: f32[16,128], index: 1, kind: input, shape index: {}]
  %s2 = inlined_call_operand.hbm [shape: f32[1,8,128], index: 2, kind: output, shape index: {}]
  %s3 = sld [smem:[#allocation0]]
  $region30: #{tpu_custom_call.1} parent=0
    _
  %s5 = ssub.s32 1, %s3
  %s6 = scalar_select 0, %s5, %s3
  $region1: #{tpu_custom_call.1} parent=0
    #allocation2 [shape = 'u8[8192]{0}', space=vmem, size = 0x2000, scoped, tag = 'input window, operand 0, single buffered']
    #allocation3 [shape = 's32[1]{0}', space=sflag, size = 0x4, scoped, tag = 'scoped memory for tpu_custom_call.1']
    #allocation4 [shape = 's32[1]{0}', space=sflag, size = 0x4, scoped, tag = 'scoped memory for tpu_custom_call.1']
    #allocation5 [shape = 'u8[8192]{0}', space=vmem, size = 0x2000, scoped, tag = 'input window, operand 1, single buffered']
    #allocation6 [shape = 's32[1]{0}', space=sflag, size = 0x4, scoped, tag = 'scoped memory for tpu_custom_call.1']
    #allocation7 [shape = 'u8[4096]{0}', space=vmem, size = 0x1000, scoped, tag = 'output window, operand 0, single buffered']
    %7 = vsyncpa [#allocation3], 0
    %8 = vsyncpa [#allocation6], 0
    %9 = vsyncpa [#allocation4], 0
    // Predicated region
    $region2: #{tpu_custom_call.1} parent=1 // pred_check
      _
    $region3: #{tpu_custom_call.1} parent=1 // pred_check_branch
      %11 = sbr.rel (0) target = $region5
    $region4: #{tpu_custom_call.1} parent=1 // pred_region
      %s12 = sadd.s32 0, 0
      %s13 = smul.u32 2, %s12
      %s15 = ssub.s32 256, 256
      %16 = vsyncadd [#allocation3], %s15
      %s17 = smul.addr %s13, 128
      %s18 = scalar_lea.hbm %s0, %s17
      %s19 = sshll.u32 [#allocation2], 4
      %s20 = int_to_ptr.vmem [resolvable:$true] %s19
      %25 = dma.hbm_to_vmem [thread:$0]  %s18, 256, %s20, [#allocation3], 128, 128, 8
    $region5: #{tpu_custom_call.1} parent=1 // pred_fallthru
      _
    // Predicated region
    $region6: #{tpu_custom_call.1} parent=1 // pred_check
      _
    $region7: #{tpu_custom_call.1} parent=1 // pred_check_branch
      %27 = sbr.rel (0) target = $region9
    $region8: #{tpu_custom_call.1} parent=1 // pred_region
      %s28 = sadd.s32 0, 0
      %s29 = smul.u32 2, %s28
      %s31 = ssub.s32 256, 256
      %32 = vsyncadd [#allocation6], %s31
      %s33 = smul.addr %s29, 128
      %s34 = scalar_lea.hbm %s1, %s33
      %s35 = sshll.u32 [#allocation5], 4
      %s36 = int_to_ptr.vmem [resolvable:$true] %s35
      %41 = dma.hbm_to_vmem [thread:$0]  %s34, 256, %s36, [#allocation6], 128, 128, 8
    $region9: #{tpu_custom_call.1} parent=1 // pred_fallthru
      _
    // Predicated region
    $region10: #{tpu_custom_call.1} parent=1 // pred_check
      _
    $region11: #{tpu_custom_call.1} parent=1 // pred_check_branch
      %43 = sbr.rel (0) target = $region13
    $region12: #{tpu_custom_call.1} parent=1 // pred_region
      %44 = dma.done [#allocation3], 256
    $region13: #{tpu_custom_call.1} parent=1 // pred_fallthru
      _
    // Predicated region
    $region14: #{tpu_custom_call.1} parent=1 // pred_check
      _
    $region15: #{tpu_custom_call.1} parent=1 // pred_check_branch
      %46 = sbr.rel (0) target = $region17
    $region16: #{tpu_custom_call.1} parent=1 // pred_region
      %47 = dma.done [#allocation6], 256
    $region17: #{tpu_custom_call.1} parent=1 // pred_fallthru
      _
    %s48 = sadd.s32 0, 0
    %s49 = smul.u32 2, %s48
    %s50 = sadd.s32 0, 0
    %s51 = smul.u32 2, %s50
    %p52 = scmp.eq.s32.totalorder 0, 0
    // Predicated region
    $region18: #{tpu_custom_call.1} parent=1 // pred_check
      %p53 = pneg %p52
    $region19: #{tpu_custom_call.1} parent=1 // pred_check_branch
      %55 = sbr.rel (%p53) target = $region21
    $region20: #{tpu_custom_call.1} parent=1 // pred_region
      %56 = vst [vmem:[#allocation7] sm:$0xff] 0.0
    $region21: #{tpu_custom_call.1} parent=1 // pred_fallthru
      _
    %s57 = sadd.s32 0, 0
    %s58 = smul.u32 %s57, 16
    %v59 = vlaneseq
    %v60 = vshrl.u32 %v59, 7
    %v61 = vadd.s32 %v60, 8
    %v62 = vld [vmem:[#allocation2] sm:$0xff]
    %v63 = vld [vmem:[#allocation2 + $0x8] sm:$0xff]
    %v64 = vld [vmem:[#allocation5] sm:$0xff]
    %v65 = vld [vmem:[#allocation5 + $0x8] sm:$0xff]
    %v66 = vsub.f32 %v62, %v64
    %v67 = vsub.f32 %v63, %v65
    %v68 = vand.u32 2147483647, %v66
    %v69 = vand.u32 2147483647, %v67
    %v70 = vstv %s58
    %v71 = vadd.s32 %v60, %v70
    %v72 = vadd.s32 %v61, %v70
    %vm73 = vcmp.lt.s32.totalorder %v71, 16
    %vm74 = vcmp.lt.s32.totalorder %v72, 16
    %v75 = vsel %vm73, %v68, 0.0
    %v76 = vsel %vm74, %v69, 0.0
    %v77 = vld [vmem:[#allocation7] sm:$0xff]
    %v78 = vadd.f32 %v75, %v76
    %v79 = vadd.f32 %v77, %v78
    %80 = vst [vmem:[#allocation7] sm:$0xff] %v79
    // Predicated region
    $region22: #{tpu_custom_call.1} parent=1 // pred_check
      _
    $region23: #{tpu_custom_call.1} parent=1 // pred_check_branch
      %82 = sbr.rel (0) target = $region25
    $region24: #{tpu_custom_call.1} parent=1 // pred_region
      %s84 = ssub.s32 128, 128
      %85 = vsyncadd [#allocation4], %s84
      %s87 = sshll.u32 [#allocation7], 4
      %s88 = int_to_ptr.vmem [resolvable:$true] %s87
      %90 = dma.vmem_to_hbm [thread:$0]  %s88, 128, %s2, [#allocation4]
    $region25: #{tpu_custom_call.1} parent=1 // pred_fallthru
      _
    // Predicated region
    $region26: #{tpu_custom_call.1} parent=1 // pred_check
      _
    $region27: #{tpu_custom_call.1} parent=1 // pred_check_branch
      %92 = sbr.rel (0) target = $region29
    $region28: #{tpu_custom_call.1} parent=1 // pred_region
      %93 = dma.done [#allocation4], 128
    $region29: #{tpu_custom_call.1} parent=1 // pred_fallthru
      _
    %94 = vsyncpa [#allocation3], 1
    %95 = vsyncpa [#allocation6], 1
    %96 = vsyncpa [#allocation4], 1

</llo_original>
